<compile_context>
chip_gen: v7x
topology: tpu7x:2x2x1
jax: 0.10.0
libtpu: 0.0.40
codegen_flags: <defaults>
</compile_context>

<pallas_src>
import math

import jax
import jax.numpy as jnp
from jax.experimental import pallas as pl
from jax.experimental.pallas import tpu as pltpu


# ----------------------------- config ---------------------------------------
B = 2                              # batch
IN_FEATURES = 32                   # base_layer.in_features (hidden=32)
NUM_CLASSES = 10                   # num_class
OUT = NUM_CLASSES                  # base_layer.out_features
RANK = 10                          # module default
ALPHA = 16                         # module default
TOPK = 3                           # module default
NR = NUM_CLASSES * RANK            # 100
SCALING = ALPHA / RANK             # 1.6
LANES = 128                        # NR and OUT are zero-padded to this width

# Row layout of the packed constant slab (all block starts are multiples of 8,
# all blocks 128 lanes wide -> every in-kernel slice is sublane/lane aligned).
R_W = 0                            # [0, 32)    base_layer.weight^T   (32, OUT)
R_A = R_W + IN_FEATURES            # [32, 64)   lora_A^T              (32, NR)
R_LB = R_A + IN_FEATURES           # [64, 192)  (scaling*lora_B)^T    (NR, OUT), 128 rows
R_B2 = R_LB + LANES                # [192, 200) 2*bias in row 192     (1, OUT)
SLAB_ROWS = R_B2 + 8               # 200


# ----------------------------- Pallas kernel --------------------------------
def calora_kernel(x_ref, mask_ref, slab_ref, o_ref):
    # x_ref:    (B, IN_FEATURES)   fc input
    # mask_ref: (B, 128)           per-sample top-k * class mask (0/1), zero past NR
    # slab_ref: (SLAB_ROWS, 128)   packed constants (row layout above)
    # o_ref:    (B, OUT)
    x = x_ref[...]
    w_t = slab_ref[R_W:R_W + IN_FEATURES, :]      # (32, 128) base weight^T (lanes>=OUT zero)
    a_t = slab_ref[R_A:R_A + IN_FEATURES, :]      # (32, 128) lora_A^T      (lanes>=NR  zero)
    lb_t = slab_ref[R_LB:R_LB + LANES, :]         # (128,128) (scaling*lora_B)^T, zero-padded
    bias2 = slab_ref[R_B2:R_B2 + 1, :]            # (1, 128)  2*bias (module adds bias twice)

    orig = jnp.dot(x, w_t, preferred_element_type=jnp.float32)    # (B,128) base_layer matmul
    a_out = jnp.dot(x, a_t, preferred_element_type=jnp.float32)   # (B,128) x @ lora_A^T
    t = a_out * mask_ref[...]                                     # masked LoRA activations
    lora = jnp.dot(t, lb_t, preferred_element_type=jnp.float32)   # (B,128), scaling folded in
    out = orig + lora + bias2                                     # double-bias folded
    o_ref[...] = out[:, :OUT]                                     # lane-0-aligned narrow store


# --------------------- one-time constant preprocessing -----------------------
def build_constant_slab(w, b, lora_A, lora_B):
    """Pack all constant operands into ONE sublane/lane-padded f32 slab.

    Built once when parameters are loaded (outside the per-call jit path), so
    each forward pays a single constant-input DMA and no per-call
    transpose/concat/scale HLO ops.
    """
    slab = jnp.zeros((SLAB_ROWS, LANES), jnp.float32)
    slab = slab.at[R_W:R_W + IN_FEATURES, :OUT].set(w.T)
    slab = slab.at[R_A:R_A + IN_FEATURES, :NR].set(lora_A.T)
    slab = slab.at[R_LB:R_LB + NR, :OUT].set((SCALING * lora_B).T)
    slab = slab.at[R_B2, :OUT].set(2.0 * b)      # forward adds base_layer bias twice
    return slab


# ----------------------------- glue (plain JAX) ------------------------------
def topk_lora_mask_padded(pseudo_index, class_mask):
    """UCALoraLinear._topk_lora_mask without the scatter, padded to 128 lanes.

    Uses an iota==index compare instead of zeros().at[...].set(1) (scatter
    lowers poorly on TPU).  Result is {0,1}; matches torch when pseudo_index
    has no ties.
    """
    bn = pseudo_index.shape[0]
    _, idx = jax.lax.top_k(pseudo_index, TOPK)                          # (B, k)
    classes = jnp.arange(NUM_CLASSES, dtype=idx.dtype)
    onehot = jnp.any(classes[None, :, None] == idx[:, None, :], axis=-1)
    onehot = onehot.astype(jnp.float32)                                 # (B, num_class)
    m = (onehot[:, :, None] * class_mask[None, :, :]).reshape(bn, NR)   # (B, NR)
    return jnp.pad(m, ((0, 0), (0, LANES - NR)))                        # (B, 128)


@jax.jit
def calora_forward(x, pseudo_index, slab, class_mask):
    # TODO(synk): torch.topk / scatter_ mask construction has no Mosaic lowering;
    # it stays here as cheap XLA glue and feeds the kernel a precomputed mask.
    mask = topk_lora_mask_padded(pseudo_index, class_mask)              # (B, 128)
    bn = x.shape[0]
    vmem = pl.BlockSpec(memory_space=pltpu.MemorySpace.VMEM)
    return pl.pallas_call(
        calora_kernel,
        out_shape=jax.ShapeDtypeStruct((bn, OUT), jnp.float32),
        in_specs=[vmem, vmem, vmem],
        out_specs=vmem,
    )(x, mask, slab)


def reference_forward(x, pseudo_index, params):
    """Pure-JAX mirror of the PyTorch forward (masked-bmm formulation)."""
    w, b, lora_A, lora_B, class_mask = params
    orig = x @ w.T + b                                                  # base_layer(x)
    bn = x.shape[0]
    _, idx = jax.lax.top_k(pseudo_index, TOPK)
    onehot = jnp.zeros((bn, NUM_CLASSES), jnp.float32)
    onehot = onehot.at[jnp.arange(bn)[:, None], idx].set(1.0)           # scatter_, like torch
    m = (onehot[:, :, None] * class_mask[None, :, :]).reshape(bn, NR)   # (B, NR)
    A = lora_A[None, :, :] * m[:, :, None]                              # (B, NR, IN)
    Bm = lora_B[None, :, :] * m[:, None, :]                             # (B, OUT, NR)
    delta_w = jnp.einsum("bon,bni->boi", Bm, A)                         # bmm(B, A)
    lora = jnp.einsum("bi,boi->bo", x, delta_w) * SCALING
    return orig + lora + b                                              # bias added twice


def make_params(key):
    k1, k2, k3, k4 = jax.random.split(key, 4)
    bound = 1.0 / math.sqrt(IN_FEATURES)
    # base_layer: nn.Linear(IN_FEATURES, OUT)
    w = jax.random.uniform(k1, (OUT, IN_FEATURES), jnp.float32, -bound, bound)
    b = jax.random.uniform(k2, (OUT,), jnp.float32, -bound, bound)
    # lora_A: kaiming_uniform(a=sqrt(5)) == U(-1/sqrt(fan_in), 1/sqrt(fan_in))
    lora_A = jax.random.uniform(k3, (NR, IN_FEATURES), jnp.float32, -bound, bound)
    # PyTorch __init__ zeros lora_B; use small nonzero values so the LoRA path
    # is actually exercised by the correctness check.
    lora_B = 0.05 * jax.random.normal(k4, (OUT, NR), jnp.float32)
    # class_mask: ones, classes 0..6 zeroed (as in the module)
    class_mask = jnp.ones((NUM_CLASSES, RANK), jnp.float32).at[:7, :].set(0.0)
    return w, b, lora_A, lora_B, class_mask


if __name__ == "__main__":
    key = jax.random.PRNGKey(0)
    kx, kp, kparams = jax.random.split(key, 3)
    x = jax.random.normal(kx, (B, IN_FEATURES), jnp.float32)
    pseudo_index = jax.random.normal(kp, (B, NUM_CLASSES), jnp.float32)
    params = make_params(kparams)
    w, b_vec, lora_A, lora_B, class_mask = params

    # one-time constant preprocessing (outside the per-call jit path)
    slab = jax.block_until_ready(build_constant_slab(w, b_vec, lora_A, lora_B))

    out = calora_forward(x, pseudo_index, slab, class_mask)
    out = jax.block_until_ready(out)

    ref = reference_forward(x, pseudo_index, params)
    assert out.shape == (B, OUT), out.shape
    assert jnp.allclose(out, ref, rtol=1e-4, atol=1e-5), (out, ref)
    print("KERNEL_OK")
</pallas_src>

<mosaic_0001>
module attributes {stable_mosaic.version = 11 : i64} {
  func.func @calora_kernel(%arg0: memref<2x32xf32, #tpu.memory_space<vmem>>, %arg1: memref<2x128xf32, #tpu.memory_space<vmem>>, %arg2: memref<200x128xf32, #tpu.memory_space<vmem>>, %arg3: memref<2x10xf32, #tpu.memory_space<vmem>>) attributes {dimension_semantics = [], scalar_prefetch = 0 : i64, scratch_operands = 0 : i64, tpu.core_type = #tpu.core_type<tc>} {
    %c0 = arith.constant 0 : index
    %c0_0 = arith.constant 0 : index
    %0 = vector.load %arg0[%c0, %c0_0] : memref<2x32xf32, #tpu.memory_space<vmem>>, vector<2x32xf32>
    %c0_1 = arith.constant 0 : index
    %c0_2 = arith.constant 0 : index
    %1 = vector.load %arg2[%c0_1, %c0_2] : memref<200x128xf32, #tpu.memory_space<vmem>>, vector<32x128xf32>
    %c32 = arith.constant 32 : index
    %c0_3 = arith.constant 0 : index
    %2 = vector.load %arg2[%c32, %c0_3] : memref<200x128xf32, #tpu.memory_space<vmem>>, vector<32x128xf32>
    %c64 = arith.constant 64 : index
    %c0_4 = arith.constant 0 : index
    %3 = vector.load %arg2[%c64, %c0_4] : memref<200x128xf32, #tpu.memory_space<vmem>>, vector<128x128xf32>
    %c192 = arith.constant 192 : index
    %c0_5 = arith.constant 0 : index
    %4 = vector.load %arg2[%c192, %c0_5] : memref<200x128xf32, #tpu.memory_space<vmem>>, vector<1x128xf32>
    %cst = arith.constant dense<0.000000e+00> : vector<2x128xf32>
    %5 = tpu.matmul %0, %1, %cst {dimension_numbers = #tpu.dot_dimension_numbers<[1], [0], [0], [1], [0, 0, 1, 1], [], []>} : vector<2x32xf32>, vector<32x128xf32>, vector<2x128xf32> -> vector<2x128xf32>
    %cst_6 = arith.constant dense<0.000000e+00> : vector<2x128xf32>
    %6 = tpu.matmul %0, %2, %cst_6 {dimension_numbers = #tpu.dot_dimension_numbers<[1], [0], [0], [1], [0, 0, 1, 1], [], []>} : vector<2x32xf32>, vector<32x128xf32>, vector<2x128xf32> -> vector<2x128xf32>
    %c0_7 = arith.constant 0 : index
    %c0_8 = arith.constant 0 : index
    %7 = vector.load %arg1[%c0_7, %c0_8] : memref<2x128xf32, #tpu.memory_space<vmem>>, vector<2x128xf32>
    %8 = arith.mulf %6, %7 : vector<2x128xf32>
    %cst_9 = arith.constant dense<0.000000e+00> : vector<2x128xf32>
    %9 = tpu.matmul %8, %3, %cst_9 {dimension_numbers = #tpu.dot_dimension_numbers<[1], [0], [0], [1], [0, 0, 1, 1], [], []>} : vector<2x128xf32>, vector<128x128xf32>, vector<2x128xf32> -> vector<2x128xf32>
    %10 = arith.addf %5, %9 : vector<2x128xf32>
    %11 = vector.broadcast %4 : vector<1x128xf32> to vector<2x128xf32>
    %12 = arith.addf %10, %11 : vector<2x128xf32>
    %13 = vector.extract_strided_slice %12 {offsets = [0, 0], sizes = [2, 10], strides = [1, 1]} : vector<2x128xf32> to vector<2x10xf32>
    %c0_10 = arith.constant 0 : index
    %c0_11 = arith.constant 0 : index
    %14 = vector.load %arg3[%c0_10, %c0_11] : memref<2x10xf32, #tpu.memory_space<vmem>>, vector<2x10xf32>
    tpu.vector_store %arg3[%c0_10, %c0_11], %13 {strides = array<i32>} : memref<2x10xf32, #tpu.memory_space<vmem>>, vector<2x10xf32>,
    return
  }
}

</mosaic_0001>

<llo_original>
// kernel: calora_forward.1
$region0: #{calora_forward.1}
  #allocation0 [shape = 'u32[]', space=smem, size = 0x4, offset = 0x4, fixed_abs, tag = 'smem constant byte address 0x4 - core index']
  #allocation1 [shape = 'u32[144,128]{1,0:T(1,128)}', space=vmem, size = 0x12000, scoped, tag = 'internal scratch']
  %s0 = inlined_call_operand.vmem [shape: f32[2,32], index: 0, kind: input, shape index: {}]
  %s1 = inlined_call_operand.vmem [shape: f32[2,128], index: 1, kind: input, shape index: {}]
  %s2 = inlined_call_operand.hbm [shape: f32[200,128], index: 2, kind: input, shape index: {}]
  %s3 = inlined_call_operand.hbm [shape: f32[2,10], index: 3, kind: output, shape index: {}]
  %s4 = sld [smem:[#allocation0]]
  $region26: #{calora_forward.1} parent=0
    _
  %s6 = ssub.s32 1, %s4
  %s7 = scalar_select 0, %s6, %s4
  $region1: #{calora_forward.1} parent=0
    #allocation2 [shape = 'u8[102400]{0}', space=vmem, size = 0x19000, scoped, tag = 'input window, operand 2, single buffered']
    #allocation3 [shape = 's32[1]{0}', space=sflag, size = 0x4, scoped, tag = 'scoped memory for calora_forward.1']
    #allocation4 [shape = 's32[1]{0}', space=sflag, size = 0x4, scoped, tag = 'scoped memory for calora_forward.1']
    #allocation5 [shape = 'u8[1024]{0}', space=vmem, size = 0x400, scoped, tag = 'output window, operand 0, single buffered']
    %8 = vsyncpa [#allocation3], 0
    %9 = vsyncpa [#allocation4], 0
    // Predicated region
    $region2: #{calora_forward.1} parent=1 // pred_check
      _
    $region3: #{calora_forward.1} parent=1 // pred_check_branch
      %11 = sbr.rel (0) target = $region5
    $region4: #{calora_forward.1} parent=1 // pred_region
      _
    $region5: #{calora_forward.1} parent=1 // pred_fallthru
      _
    // Predicated region
    $region6: #{calora_forward.1} parent=1 // pred_check
      _
    $region7: #{calora_forward.1} parent=1 // pred_check_branch
      %13 = sbr.rel (0) target = $region9
    $region8: #{calora_forward.1} parent=1 // pred_region
      _
    $region9: #{calora_forward.1} parent=1 // pred_fallthru
      _
    // Predicated region
    $region10: #{calora_forward.1} parent=1 // pred_check
      _
    $region11: #{calora_forward.1} parent=1 // pred_check_branch
      %15 = sbr.rel (0) target = $region13
    $region12: #{calora_forward.1} parent=1 // pred_region
      %s17 = ssub.s32 3200, 3200
      %18 = vsyncadd [#allocation3], %s17
      %s19 = sshll.u32 [#allocation2], 4
      %s20 = int_to_ptr.vmem [resolvable:$true] %s19
      %25 = dma.hbm_to_vmem [thread:$0]  %s2, 3200, %s20, [#allocation3], 128, 128, 8
    $region13: #{calora_forward.1} parent=1 // pred_fallthru
      _
    // Predicated region
    $region14: #{calora_forward.1} parent=1 // pred_check
      _
    $region15: #{calora_forward.1} parent=1 // pred_check_branch
      %27 = sbr.rel (0) target = $region17
    $region16: #{calora_forward.1} parent=1 // pred_region
      %28 = dma.done [#allocation3], 3200
    $region17: #{calora_forward.1} parent=1 // pred_fallthru
      _
    %v29 = vld [vmem:[%s0] sm:$0x3]
    %v30 = vld [vmem:[#allocation2] sm:$0xff]
    %v31 = vld [vmem:[#allocation2 + $0x8] sm:$0xff]
    %v32 = vld [vmem:[#allocation2 + $0x10] sm:$0xff]
    %v33 = vld [vmem:[#allocation2 + $0x18] sm:$0xff]
    %v34 = vld [vmem:[#allocation2 + $0x20] sm:$0xff]
    %v35 = vld [vmem:[#allocation2 + $0x28] sm:$0xff]
    %v36 = vld [vmem:[#allocation2 + $0x30] sm:$0xff]
    %v37 = vld [vmem:[#allocation2 + $0x38] sm:$0xff]
    %v38 = vld [vmem:[#allocation2 + $0x40] sm:$0xff]
    %v39 = vld [vmem:[#allocation2 + $0x48] sm:$0xff]
    %v40 = vld [vmem:[#allocation2 + $0x50] sm:$0xff]
    %v41 = vld [vmem:[#allocation2 + $0x58] sm:$0xff]
    %v42 = vld [vmem:[#allocation2 + $0x60] sm:$0xff]
    %v43 = vld [vmem:[#allocation2 + $0x68] sm:$0xff]
    %v44 = vld [vmem:[#allocation2 + $0x70] sm:$0xff]
    %v45 = vld [vmem:[#allocation2 + $0x78] sm:$0xff]
    %v46 = vld [vmem:[#allocation2 + $0x80] sm:$0xff]
    %v47 = vld [vmem:[#allocation2 + $0x88] sm:$0xff]
    %v48 = vld [vmem:[#allocation2 + $0x90] sm:$0xff]
    %v49 = vld [vmem:[#allocation2 + $0x98] sm:$0xff]
    %v50 = vld [vmem:[#allocation2 + $0xa0] sm:$0xff]
    %v51 = vld [vmem:[#allocation2 + $0xa8] sm:$0xff]
    %v52 = vld [vmem:[#allocation2 + $0xb0] sm:$0xff]
    %v53 = vld [vmem:[#allocation2 + $0xb8] sm:$0xff]
    %v54 = vld [vmem:[#allocation2 + $0xc0] sm:$0x1]
    %vm55 = vcmask 261120
    %v57 = vsel %vm55, %v29, 0
    %59 = vmatprep.subr.mxu0 0.0
    %60 = vmatpush1.msra.mxu0 %v34
    %61 = vmatprep.subr.mxu0 0.0
    %62 = vmatpush1.msra.mxu0 %v35
    %63 = vmatprep.subr.mxu0 0.0
    %64 = vmatpush1.msra.mxu0 %v36
    %65 = vmatprep.subr.mxu0 0.0
    %66 = vmatpush1.msra.mxu0 %v37
    %67 = vmatprep.subr.mxu0 0.0
    %68 = vmatpush1.msra.mxu0 0.0
    %69 = vmatprep.subr.mxu0 0.0
    %70 = vmatpush1.msra.mxu0 0.0
    %71 = vmatprep.subr.mxu0 0.0
    %72 = vmatpush1.msra.mxu0 0.0
    %73 = vmatprep.subr.mxu0 0.0
    %74 = vmatpush1.msra.mxu0 0.0
    %75 = vmatprep.subr.mxu0 0.0
    %76 = vmatpush1.msra.mxu0 0.0
    %77 = vmatprep.subr.mxu0 0.0
    %78 = vmatpush1.msra.mxu0 0.0
    %79 = vmatprep.subr.mxu0 0.0
    %80 = vmatpush1.msra.mxu0 0.0
    %81 = vmatprep.subr.mxu0 0.0
    %82 = vmatpush1.msra.mxu0 0.0
    %83 = vmatprep.subr.mxu0 0.0
    %84 = vmatpush1.msra.mxu0 0.0
    %85 = vmatprep.subr.mxu0 0.0
    %86 = vmatpush1.msra.mxu0 0.0
    %87 = vmatprep.subr.mxu0 0.0
    %88 = vmatpush1.msra.mxu0 0.0
    %89 = vmatprep.subr.mxu0 0.0
    %90 = vmatpush1.msra.mxu0 0.0
    %91 = vmatprep.subr.mxu0 0.0
    %92 = vmatpush1.msra.mxu0 0.0
    %93 = vmatprep.subr.mxu0 0.0
    %94 = vmatpush1.msra.mxu0 0.0
    %95 = vmatprep.subr.mxu0 0.0
    %96 = vmatpush1.msra.mxu0 0.0
    %97 = vmatprep.subr.mxu0 0.0
    %98 = vmatpush1.msra.mxu0 0.0
    %99 = vmatprep.subr.mxu0 0.0
    %100 = vmatpush1.msra.mxu0 0.0
    %101 = vmatprep.subr.mxu0 0.0
    %102 = vmatpush1.msra.mxu0 0.0
    %103 = vmatprep.subr.mxu0 0.0
    %104 = vmatpush1.msra.mxu0 0.0
    %105 = vmatprep.subr.mxu0 0.0
    %106 = vmatpush1.msra.mxu0 0.0
    %107 = vmatprep.subr.mxu0 0.0
    %108 = vmatpush1.msra.mxu0 0.0
    %109 = vmatprep.subr.mxu0 0.0
    %110 = vmatpush1.msra.mxu0 0.0
    %111 = vmatprep.subr.mxu0 0.0
    %112 = vmatpush1.msra.mxu0 0.0
    %113 = vmatprep.subr.mxu0 0.0
    %114 = vmatpush1.msra.mxu0 0.0
    %115 = vmatprep.subr.mxu0 0.0
    %116 = vmatpush1.msra.mxu0 0.0
    %117 = vmatprep.subr.mxu0 0.0
    %118 = vmatpush1.msra.mxu0 0.0
    %119 = vmatprep.subr.mxu0 0.0
    %120 = vmatpush1.msra.mxu0 0.0
    %121 = vmatprep.subr.mxu0 0.0
    %122 = vmatpush1.msra.mxu0 0.0
    %123 = vmatprep.mubr.f32.mxu0 0.0
    %124 = vmatmul.mubr.f32.gmra.mrb[0].mxu0 %v57
    %v125 = vpop.f32.mrb[0].mxu0
    %v126 = vadd.f32 0.0, %v125
    %v127 = vpop.f32.mrb[0].mxu0
    %128 = vdwg.mxu0
    %v129 = vld [vmem:[%s1] sm:$0x3]
    %v130 = vmul.f32 %v126, %v129
    %131 = vmatprep.subr.mxu0 0.0
    %132 = vmatpush1.msra.mxu0 %v38
    %133 = vmatprep.subr.mxu0 0.0
    %134 = vmatpush1.msra.mxu0 %v39
    %135 = vmatprep.subr.mxu0 0.0
    %136 = vmatpush1.msra.mxu0 %v40
    %137 = vmatprep.subr.mxu0 0.0
    %138 = vmatpush1.msra.mxu0 %v41
    %139 = vmatprep.subr.mxu0 0.0
    %140 = vmatpush1.msra.mxu0 %v42
    %141 = vmatprep.subr.mxu0 0.0
    %142 = vmatpush1.msra.mxu0 %v43
    %143 = vmatprep.subr.mxu0 0.0
    %144 = vmatpush1.msra.mxu0 %v44
    %145 = vmatprep.subr.mxu0 0.0
    %146 = vmatpush1.msra.mxu0 %v45
    %147 = vmatprep.subr.mxu0 0.0
    %148 = vmatpush1.msra.mxu0 %v46
    %149 = vmatprep.subr.mxu0 0.0
    %150 = vmatpush1.msra.mxu0 %v47
    %151 = vmatprep.subr.mxu0 0.0
    %152 = vmatpush1.msra.mxu0 %v48
    %153 = vmatprep.subr.mxu0 0.0
    %154 = vmatpush1.msra.mxu0 %v49
    %155 = vmatprep.subr.mxu0 0.0
    %156 = vmatpush1.msra.mxu0 %v50
    %157 = vmatprep.subr.mxu0 0.0
    %158 = vmatpush1.msra.mxu0 %v51
    %159 = vmatprep.subr.mxu0 0.0
    %160 = vmatpush1.msra.mxu0 %v52
    %161 = vmatprep.subr.mxu0 0.0
    %162 = vmatpush1.msra.mxu0 %v53
    %163 = vmatprep.subr.mxu0 0.0
    %164 = vmatpush1.msra.mxu0 0.0
    %165 = vmatprep.subr.mxu0 0.0
    %166 = vmatpush1.msra.mxu0 0.0
    %167 = vmatprep.subr.mxu0 0.0
    %168 = vmatpush1.msra.mxu0 0.0
    %169 = vmatprep.subr.mxu0 0.0
    %170 = vmatpush1.msra.mxu0 0.0
    %171 = vmatprep.subr.mxu0 0.0
    %172 = vmatpush1.msra.mxu0 0.0
    %173 = vmatprep.subr.mxu0 0.0
    %174 = vmatpush1.msra.mxu0 0.0
    %175 = vmatprep.subr.mxu0 0.0
    %176 = vmatpush1.msra.mxu0 0.0
    %177 = vmatprep.subr.mxu0 0.0
    %178 = vmatpush1.msra.mxu0 0.0
    %179 = vmatprep.subr.mxu0 0.0
    %180 = vmatpush1.msra.mxu0 0.0
    %181 = vmatprep.subr.mxu0 0.0
    %182 = vmatpush1.msra.mxu0 0.0
    %183 = vmatprep.subr.mxu0 0.0
    %184 = vmatpush1.msra.mxu0 0.0
    %185 = vmatprep.subr.mxu0 0.0
    %186 = vmatpush1.msra.mxu0 0.0
    %187 = vmatprep.subr.mxu0 0.0
    %188 = vmatpush1.msra.mxu0 0.0
    %189 = vmatprep.subr.mxu0 0.0
    %190 = vmatpush1.msra.mxu0 0.0
    %191 = vmatprep.subr.mxu0 0.0
    %192 = vmatpush1.msra.mxu0 0.0
    %193 = vmatprep.subr.mxu0 0.0
    %194 = vmatpush1.msra.mxu0 0.0
    %195 = vmatprep.mubr.f32.mxu0 0.0
    %196 = vmatmul.mubr.f32.gmra.mrb[0].mxu0 %v130
    %v197 = vpop.f32.mrb[0].mxu0
    %v198 = vadd.f32 0.0, %v197
    %v199 = vpop.f32.mrb[0].mxu0
    %200 = vdwg.mxu0
    %201 = vmatprep.subr.mxu0 0.0
    %202 = vmatpush1.msra.mxu0 %v30
    %203 = vmatprep.subr.mxu0 0.0
    %204 = vmatpush1.msra.mxu0 %v31
    %205 = vmatprep.subr.mxu0 0.0
    %206 = vmatpush1.msra.mxu0 %v32
    %207 = vmatprep.subr.mxu0 0.0
    %208 = vmatpush1.msra.mxu0 %v33
    %209 = vmatprep.subr.mxu0 0.0
    %210 = vmatpush1.msra.mxu0 0.0
    %211 = vmatprep.subr.mxu0 0.0
    %212 = vmatpush1.msra.mxu0 0.0
    %213 = vmatprep.subr.mxu0 0.0
    %214 = vmatpush1.msra.mxu0 0.0
    %215 = vmatprep.subr.mxu0 0.0
    %216 = vmatpush1.msra.mxu0 0.0
    %217 = vmatprep.subr.mxu0 0.0
    %218 = vmatpush1.msra.mxu0 0.0
    %219 = vmatprep.subr.mxu0 0.0
    %220 = vmatpush1.msra.mxu0 0.0
    %221 = vmatprep.subr.mxu0 0.0
    %222 = vmatpush1.msra.mxu0 0.0
    %223 = vmatprep.subr.mxu0 0.0
    %224 = vmatpush1.msra.mxu0 0.0
    %225 = vmatprep.subr.mxu0 0.0
    %226 = vmatpush1.msra.mxu0 0.0
    %227 = vmatprep.subr.mxu0 0.0
    %228 = vmatpush1.msra.mxu0 0.0
    %229 = vmatprep.subr.mxu0 0.0
    %230 = vmatpush1.msra.mxu0 0.0
    %231 = vmatprep.subr.mxu0 0.0
    %232 = vmatpush1.msra.mxu0 0.0
    %233 = vmatprep.subr.mxu0 0.0
    %234 = vmatpush1.msra.mxu0 0.0
    %235 = vmatprep.subr.mxu0 0.0
    %236 = vmatpush1.msra.mxu0 0.0
    %237 = vmatprep.subr.mxu0 0.0
    %238 = vmatpush1.msra.mxu0 0.0
    %239 = vmatprep.subr.mxu0 0.0
    %240 = vmatpush1.msra.mxu0 0.0
    %241 = vmatprep.subr.mxu0 0.0
    %242 = vmatpush1.msra.mxu0 0.0
    %243 = vmatprep.subr.mxu0 0.0
    %244 = vmatpush1.msra.mxu0 0.0
    %245 = vmatprep.subr.mxu0 0.0
    %246 = vmatpush1.msra.mxu0 0.0
    %247 = vmatprep.subr.mxu0 0.0
    %248 = vmatpush1.msra.mxu0 0.0
    %249 = vmatprep.subr.mxu0 0.0
    %250 = vmatpush1.msra.mxu0 0.0
    %251 = vmatprep.subr.mxu0 0.0
    %252 = vmatpush1.msra.mxu0 0.0
    %253 = vmatprep.subr.mxu0 0.0
    %254 = vmatpush1.msra.mxu0 0.0
    %255 = vmatprep.subr.mxu0 0.0
    %256 = vmatpush1.msra.mxu0 0.0
    %257 = vmatprep.subr.mxu0 0.0
    %258 = vmatpush1.msra.mxu0 0.0
    %259 = vmatprep.subr.mxu0 0.0
    %260 = vmatpush1.msra.mxu0 0.0
    %261 = vmatprep.subr.mxu0 0.0
    %262 = vmatpush1.msra.mxu0 0.0
    %263 = vmatprep.subr.mxu0 0.0
    %264 = vmatpush1.msra.mxu0 0.0
    %265 = vmatprep.mubr.f32.mxu0 0.0
    %266 = vmatmul.mubr.f32.gmra.mrb[0].mxu0 %v57
    %v267 = vpop.f32.mrb[0].mxu0
    %v268 = vadd.f32 %v198, %v267
    %v269 = vpop.f32.mrb[0].mxu0
    %270 = vdwg.mxu0
    %v271 = vlaneseq
    %v272 = vshrl.u32 %v271, 7
    %v273 = vsub.s32 0, %v272
    %v274 = vrot.slane %v54, %v273
    %v275 = vadd.f32 %v268, %v274
    %vm276 = vcmask 74752
    %277 = vst.msk [vmem:[#allocation5] sm:$0x3] %vm276, %v275
    // Predicated region
    $region18: #{calora_forward.1} parent=1 // pred_check
      _
    $region19: #{calora_forward.1} parent=1 // pred_check_branch
      %279 = sbr.rel (0) target = $region21
    $region20: #{calora_forward.1} parent=1 // pred_region
      %s281 = ssub.s32 32, 32
      %282 = vsyncadd [#allocation4], %s281
      %s284 = sshll.u32 [#allocation5], 4
      %s285 = int_to_ptr.vmem [resolvable:$true] %s284
      %287 = dma.vmem_to_hbm [thread:$0]  %s285, 32, %s3, [#allocation4]
    $region21: #{calora_forward.1} parent=1 // pred_fallthru
      _
    // Predicated region
    $region22: #{calora_forward.1} parent=1 // pred_check
      _
    $region23: #{calora_forward.1} parent=1 // pred_check_branch
      %289 = sbr.rel (0) target = $region25
    $region24: #{calora_forward.1} parent=1 // pred_region
      %290 = dma.done [#allocation4], 32
    $region25: #{calora_forward.1} parent=1 // pred_fallthru
      _
    %291 = vsyncpa [#allocation3], 1
    %292 = vsyncpa [#allocation4], 1

</llo_original>
